<compile_context>
chip_gen: v7x
topology: tpu7x:2x2x1
jax: 0.10.0
libtpu: 0.0.40
codegen_flags: <defaults>
</compile_context>

<pallas_src>
import functools

import jax
import jax.numpy as jnp
from jax.experimental import pallas as pl
from jax.experimental.pallas import tpu as pltpu

MARGIN = 0.1
EPS = 1e-8  # nn.CosineSimilarity default eps


def _round_up(v, m):
    return (v + m - 1) // m * m


def _cdiv(a, b):
    return (a + b - 1) // b


def _prefers_256_mxu():
    # v6e / v7x have 2x256x256 MXUs; earlier generations are 128-tiled.
    try:
        kind = jax.devices()[0].device_kind.lower()
        return not any(t in kind for t in ("v2", "v3", "v4", "v5"))
    except Exception:
        return False


def _max_margin_kernel(x_ref, chat_ref, that_ref, o_ref, *, batch, pad_cols, margin):
    i = pl.program_id(0)
    TB = x_ref.shape[0]

    # Normalize only the streamed input rows (f32 on VPU, rsqrt on EUP).
    x32 = x_ref[...].astype(jnp.float32)                                   # (TB, Dp)
    inv_xn = jax.lax.rsqrt(
        jnp.maximum(jnp.sum(x32 * x32, axis=1, keepdims=True), EPS * EPS))
    xhat32 = x32 * inv_xn                                                  # (TB, Dp) f32

    # Single MXU matmul on pre-normalized operands -> cosine directly.
    chat = chat_ref[...]                                                   # (Cp, Dp), pre-normalized
    cos = jax.lax.dot_general(
        xhat32.astype(chat.dtype), chat, (((1,), (1,)), ((), ())),
        preferred_element_type=jnp.float32)                                # (TB, Cp)

    # Ground-truth cosine from the pre-gathered, pre-normalized target rows (f32 VPU).
    target_cos = jnp.sum(xhat32 * that_ref[...].astype(jnp.float32),
                         axis=1, keepdims=True)                            # (TB, 1)

    # Row validity via a (TB, 1) sublane iota only; invalid (padded-batch) rows get a
    # large negative delta so their hinge terms vanish under the relu -- no (TB, Cp) mask.
    row = i * TB + jax.lax.broadcasted_iota(jnp.int32, (TB, 1), 0)
    delta = jnp.where(row < batch, margin - target_cos, -1e30)             # (TB, 1)

    # Hinge: one add + one max per (TB, Cp) element.
    hinge = jnp.maximum(0.0, cos + delta)                                  # (TB, Cp)

    # Padded class columns have cos exactly 0 (zero rows in chat), so each contributes
    # relu(delta) per valid row; subtract that analytically instead of masking.
    col_pad_fix = pad_cols * jnp.sum(jnp.maximum(0.0, delta))
    n_valid_rows = jnp.clip(batch - i * TB, 0, TB).astype(jnp.float32)

    # sum_b [ sum_c hinge - margin ] for this tile's valid rows.
    partial = jnp.sum(hinge) - col_pad_fix - margin * n_valid_rows

    # Lane-dense full-tile store of the per-tile partial (independent block per grid
    # step, so the batch axis is safely "parallel").
    o_ref[...] = jnp.broadcast_to(partial.astype(jnp.float32), o_ref.shape)


def max_margin_loss(inputs, class_embeddings, targets, *, margin=MARGIN,
                    block_b=512, use_bf16_matmul=False):
    B, D = inputs.shape
    C, D2 = class_embeddings.shape
    assert D == D2

    itemsize = jnp.dtype(inputs.dtype).itemsize
    mxu_dtype = (jnp.bfloat16
                 if (use_bf16_matmul and inputs.dtype == jnp.float32)
                 else inputs.dtype)
    mxu_itemsize = jnp.dtype(mxu_dtype).itemsize

    Dp = _round_up(D, 128)                                    # lane-dense contraction dim
    c_align = 256 if (C > 128 and _prefers_256_mxu()) else 128
    Cp = _round_up(C, c_align)                                # lane-dense class dim

    # Batch tile: aim for >= 2 tiles so ("parallel",) can use both v7x TensorCores,
    # without shrinking below 8 rows; then cap TB so the (TB, Cp) f32 epilogue working
    # set plus the resident class table stay well inside v7x's 64 MiB VMEM.
    n_want = max(2, _cdiv(B, block_b))
    TB = _round_up(max(_cdiv(B, n_want), 8), 8)
    TB = min(TB, _round_up(B, 8))
    while TB > 128 and (3 * TB * Cp * 4 + Cp * Dp * mxu_itemsize) > 40 * 1024 * 1024:
        TB = _round_up(max(TB // 2, 128), 8)
    Bp = _round_up(B, TB)
    num_tiles = Bp // TB

    # --- Hoisted (done once, not per grid step) -------------------------------------
    # Normalize the class table in f32, cast to the MXU dtype, zero-pad (exact for dots).
    cls32 = class_embeddings.astype(jnp.float32)
    inv_cn = jax.lax.rsqrt(
        jnp.maximum(jnp.sum(cls32 * cls32, axis=1, keepdims=True), EPS * EPS))
    chat_un = cls32 * inv_cn                                              # (C, D) f32
    chat = jnp.zeros((Cp, Dp), mxu_dtype).at[:C, :D].set(chat_un.astype(mxu_dtype))

    # Pre-gather + pre-normalize the per-row target embeddings (f32 stream).
    tgt_hat = chat_un[targets.astype(jnp.int32)]                          # (B, D) f32
    that = jnp.zeros((Bp, Dp), jnp.float32).at[:B, :D].set(tgt_hat)

    # Zero-padded input rows normalize to exact zeros inside the kernel (masked by delta).
    x = jnp.zeros((Bp, Dp), inputs.dtype).at[:B, :D].set(inputs)
    # ---------------------------------------------------------------------------------

    kernel = functools.partial(
        _max_margin_kernel, batch=B, pad_cols=Cp - C, margin=margin)

    # VMEM budget: streamed tiles (double-buffered), resident class table (single
    # buffer), f32 cos/hinge and xhat temporaries, output tile.
    vmem_est = (
        2 * TB * Dp * itemsize          # double-buffered x tile
        + 2 * TB * Dp * 4               # double-buffered target-embedding tile (f32)
        + 1 * Cp * Dp * mxu_itemsize    # resident, single-buffered class table
        + 3 * TB * Cp * 4               # cos / hinge f32 temporaries
        + 3 * TB * Dp * 4               # x32 / xhat f32 temporaries
        + 2 * 8 * 128 * 4               # output tile
    )
    cp_kwargs = dict(dimension_semantics=("parallel",))
    if vmem_est > 32 * 1024 * 1024:
        # Leave headroom below v7x's 64 MiB physical VMEM for compiler scratch.
        cp_kwargs["vmem_limit_bytes"] = min(int(vmem_est * 3 // 2), 48 * 1024 * 1024)

    out_shape = jax.ShapeDtypeStruct((num_tiles, 8, 128), jnp.float32)
    x_spec = pl.BlockSpec((TB, Dp), lambda i: (i, 0))          # streamed batch tiles
    t_spec = pl.BlockSpec((TB, Dp), lambda i: (i, 0))          # streamed target rows
    o_spec = pl.BlockSpec((1, 8, 128), lambda i: (i, 0, 0))

    def _call(single_buffer):
        if single_buffer:
            cls_spec = pl.BlockSpec((Cp, Dp), lambda i: (0, 0),
                                    pipeline_mode=pl.Buffered(1))
        else:
            cls_spec = pl.BlockSpec((Cp, Dp), lambda i: (0, 0))
        return pl.pallas_call(
            kernel,
            out_shape=out_shape,
            grid=(num_tiles,),
            in_specs=[x_spec, cls_spec, t_spec],
            out_specs=o_spec,
            compiler_params=pltpu.CompilerParams(**cp_kwargs),
        )(x, chat, that)

    try:
        partials = _call(True)
    except Exception:
        # Fallback: default double-buffered resident table (correctness identical).
        partials = _call(False)

    return jnp.sum(partials[:, 0, 0]) / B


def ref_loss(inputs, class_embeddings, targets, margin=MARGIN):
    # Pure-JAX reference mirroring the PyTorch forward.
    tgt_emb = class_embeddings[targets]                                  # [B, D]

    def cos_rows(a, b):
        num = jnp.sum(a * b, axis=1)
        den = jnp.maximum(jnp.linalg.norm(a, axis=1) * jnp.linalg.norm(b, axis=1), EPS)
        return num / den

    t_cos = cos_rows(inputs, tgt_emb)                                    # [B]
    num = inputs @ class_embeddings.T                                    # [B, C]
    den = jnp.maximum(jnp.linalg.norm(inputs, axis=1, keepdims=True)
                      * jnp.linalg.norm(class_embeddings, axis=1)[None, :], EPS)
    c_cos = num / den                                                    # [B, C]
    terms = jnp.maximum(0.0, margin - t_cos[:, None] + c_cos)
    return jnp.mean(jnp.sum(terms, axis=1) - margin)


if __name__ == "__main__":
    key = jax.random.PRNGKey(0)
    k1, k2, k3, k4, k5, k6 = jax.random.split(key, 6)

    # Config 1: small shapes consistent with the module (B=8, D=32, C=16).
    inputs = jax.random.normal(k1, (8, 32), dtype=jnp.float32)
    class_embeddings = jax.random.normal(k2, (16, 32), dtype=jnp.float32)
    targets = jax.random.randint(k3, (8,), 0, 16)

    loss = max_margin_loss(inputs, class_embeddings, targets)
    jax.block_until_ready(loss)
    ref = ref_loss(inputs, class_embeddings, targets)
    assert abs(float(loss) - float(ref)) < 1e-4, (float(loss), float(ref))

    # Config 2: ragged shapes + multi-tile "parallel" batch grid to exercise D/C/B
    # padding, the analytic padded-column correction and batch-row masking.
    inputs2 = jax.random.normal(k4, (20, 40), dtype=jnp.float32)
    class_embeddings2 = jax.random.normal(k5, (10, 40), dtype=jnp.float32)
    targets2 = jax.random.randint(k6, (20,), 0, 10)

    loss2 = max_margin_loss(inputs2, class_embeddings2, targets2, block_b=8)
    jax.block_until_ready(loss2)
    ref2 = ref_loss(inputs2, class_embeddings2, targets2)
    assert abs(float(loss2) - float(ref2)) < 1e-4, (float(loss2), float(ref2))

    print("KERNEL_OK")
</pallas_src>

<mosaic_0001>
module attributes {stable_mosaic.version = 11 : i64} {
  func.func @_max_margin_kernel(%arg0: i32, %arg1: memref<8x128xf32, #tpu.memory_space<vmem>>, %arg2: memref<128x128xf32, #tpu.memory_space<vmem>>, %arg3: memref<8x128xf32, #tpu.memory_space<vmem>>, %arg4: memref<1x8x128xf32, #tpu.memory_space<vmem>>) attributes {dimension_semantics = [#tpu.dimension_semantics<parallel>], iteration_bounds = array<i64: 1>, scalar_prefetch = 0 : i64, scratch_operands = 0 : i64, tpu.core_type = #tpu.core_type<tc>, window_params = [{transform_indices = @transform_0, window_bounds = array<i64: 8, 128>}, {pipeline_mode = #tpu.pipeline_mode<synchronous>, transform_indices = @transform_1, window_bounds = array<i64: 128, 128>}, {transform_indices = @transform_2, window_bounds = array<i64: 8, 128>}, {transform_indices = @transform_3, window_bounds = array<i64: 1, 8, 128>}]} {
    %c0 = arith.constant 0 : index
    %c0_0 = arith.constant 0 : index
    %0 = vector.load %arg1[%c0, %c0_0] : memref<8x128xf32, #tpu.memory_space<vmem>>, vector<8x128xf32>
    %1 = arith.mulf %0, %0 : vector<8x128xf32>
    %cst = arith.constant dense<0.000000e+00> : vector<8xf32>
    %2 = vector.multi_reduction <add>, %1, %cst [1] : vector<8x128xf32> to vector<8xf32>
    %3 = vector.shape_cast %2 : vector<8xf32> to vector<8x1xf32>
    %cst_1 = arith.constant 1.000000e-16 : f32
    %4 = vector.broadcast %cst_1 : f32 to vector<8x1xf32>
    %5 = arith.maximumf %3, %4 : vector<8x1xf32>
    %6 = math.rsqrt %5 : vector<8x1xf32>
    %7 = vector.broadcast %6 : vector<8x1xf32> to vector<8x128xf32>
    %8 = arith.mulf %0, %7 : vector<8x128xf32>
    %c0_2 = arith.constant 0 : index
    %c0_3 = arith.constant 0 : index
    %9 = vector.load %arg2[%c0_2, %c0_3] : memref<128x128xf32, #tpu.memory_space<vmem>>, vector<128x128xf32>
    %cst_4 = arith.constant dense<0.000000e+00> : vector<8x128xf32>
    %10 = tpu.matmul %8, %9, %cst_4 {dimension_numbers = #tpu.dot_dimension_numbers<[1], [1], [0], [0], [0, 0, 1, 0], [], []>} : vector<8x128xf32>, vector<128x128xf32>, vector<8x128xf32> -> vector<8x128xf32>
    %c0_5 = arith.constant 0 : index
    %c0_6 = arith.constant 0 : index
    %11 = vector.load %arg3[%c0_5, %c0_6] : memref<8x128xf32, #tpu.memory_space<vmem>>, vector<8x128xf32>
    %12 = arith.mulf %8, %11 : vector<8x128xf32>
    %cst_7 = arith.constant dense<0.000000e+00> : vector<8xf32>
    %13 = vector.multi_reduction <add>, %12, %cst_7 [1] : vector<8x128xf32> to vector<8xf32>
    %14 = vector.shape_cast %13 : vector<8xf32> to vector<8x1xf32>
    %c8_i32 = arith.constant 8 : i32
    %15 = arith.muli %arg0, %c8_i32 : i32
    %16 = tpu.iota {dimensions = array<i32: 0>} : vector<8x1xi32>
    %17 = vector.broadcast %15 : i32 to vector<8x1xi32>
    %18 = arith.addi %17, %16 : vector<8x1xi32>
    %c8_i32_8 = arith.constant 8 : i32
    %19 = vector.broadcast %c8_i32_8 : i32 to vector<8x1xi32>
    %20 = arith.cmpi slt, %18, %19 : vector<8x1xi32>
    %cst_9 = arith.constant 1.000000e-01 : f32
    %21 = vector.broadcast %cst_9 : f32 to vector<8x1xf32>
    %22 = arith.subf %21, %14 : vector<8x1xf32>
    %cst_10 = arith.constant -1.000000e+30 : f32
    %23 = vector.broadcast %cst_10 : f32 to vector<8x1xf32>
    %24 = arith.select %20, %22, %23 : vector<8x1xi1>, vector<8x1xf32>
    %25 = vector.broadcast %24 : vector<8x1xf32> to vector<8x128xf32>
    %26 = arith.addf %10, %25 : vector<8x128xf32>
    %cst_11 = arith.constant 0.000000e+00 : f32
    %27 = vector.broadcast %cst_11 : f32 to vector<8x128xf32>
    %28 = arith.maximumf %27, %26 : vector<8x128xf32>
    %cst_12 = arith.constant 0.000000e+00 : f32
    %29 = vector.broadcast %cst_12 : f32 to vector<8x1xf32>
    %30 = arith.maximumf %29, %24 : vector<8x1xf32>
    %31 = vector.shape_cast %30 : vector<8x1xf32> to vector<1x8x1xf32>
    %cst_13 = arith.constant dense<0.000000e+00> : vector<1xf32>
    %32 = vector.multi_reduction <add>, %31, %cst_13 [1, 2] : vector<1x8x1xf32> to vector<1xf32>
    %33 = vector.shape_cast %32 : vector<1xf32> to vector<1x1x1xf32>
    %34 = vector.extract %33[0, 0, 0] : f32 from vector<1x1x1xf32>
    %cst_14 = arith.constant 1.120000e+02 : f32
    %35 = arith.mulf %cst_14, %34 : f32
    %c8_i32_15 = arith.constant 8 : i32
    %36 = arith.muli %arg0, %c8_i32_15 : i32
    %c8_i32_16 = arith.constant 8 : i32
    %37 = arith.subi %c8_i32_16, %36 : i32
    %c0_i32 = arith.constant 0 : i32
    %c8_i32_17 = arith.constant 8 : i32
    %38 = arith.maxsi %c0_i32, %37 : i32
    %39 = arith.minsi %c8_i32_17, %38 : i32
    %40 = arith.sitofp %39 : i32 to f32
    %41 = vector.shape_cast %28 : vector<8x128xf32> to vector<1x8x128xf32>
    %cst_18 = arith.constant dense<0.000000e+00> : vector<1xf32>
    %42 = vector.multi_reduction <add>, %41, %cst_18 [1, 2] : vector<1x8x128xf32> to vector<1xf32>
    %43 = vector.shape_cast %42 : vector<1xf32> to vector<1x1x1xf32>
    %44 = vector.extract %43[0, 0, 0] : f32 from vector<1x1x1xf32>
    %45 = arith.subf %44, %35 : f32
    %cst_19 = arith.constant 1.000000e-01 : f32
    %46 = arith.mulf %cst_19, %40 : f32
    %47 = arith.subf %45, %46 : f32
    %48 = vector.broadcast %47 : f32 to vector<1x8x128xf32>
    %c0_20 = arith.constant 0 : index
    %c0_21 = arith.constant 0 : index
    %c0_22 = arith.constant 0 : index
    %49 = vector.load %arg4[%c0_20, %c0_21, %c0_22] : memref<1x8x128xf32, #tpu.memory_space<vmem>>, vector<1x8x128xf32>
    tpu.vector_store %arg4[%c0_20, %c0_21, %c0_22], %48 {strides = array<i32>} : memref<1x8x128xf32, #tpu.memory_space<vmem>>, vector<1x8x128xf32>,
    return
  }
  func.func @transform_0(%arg0: i32) -> (i32, i32) {
    %c0_i32 = arith.constant 0 : i32
    %c0_i32_0 = arith.constant 0 : i32
    return %arg0, %c0_i32 : i32, i32
  }
  func.func @transform_1(%arg0: i32) -> (i32, i32) {
    %c0_i32 = arith.constant 0 : i32
    %c0_i32_0 = arith.constant 0 : i32
    %c0_i32_1 = arith.constant 0 : i32
    return %c0_i32, %c0_i32_0 : i32, i32
  }
  func.func @transform_2(%arg0: i32) -> (i32, i32) {
    %c0_i32 = arith.constant 0 : i32
    %c0_i32_0 = arith.constant 0 : i32
    return %arg0, %c0_i32 : i32, i32
  }
  func.func @transform_3(%arg0: i32) -> (i32, i32, i32) {
    %c0_i32 = arith.constant 0 : i32
    %c0_i32_0 = arith.constant 0 : i32
    %c0_i32_1 = arith.constant 0 : i32
    return %arg0, %c0_i32, %c0_i32_0 : i32, i32, i32
  }
}

module attributes {stable_mosaic.version = 11 : i64} {
  func.func @_max_margin_kernel(%arg0: i32, %arg1: memref<8x128xf32, #tpu.memory_space<vmem>>, %arg2: memref<128x128xf32, #tpu.memory_space<vmem>>, %arg3: memref<8x128xf32, #tpu.memory_space<vmem>>, %arg4: memref<1x8x128xf32, #tpu.memory_space<vmem>>) attributes {dimension_semantics = [#tpu.dimension_semantics<parallel>], iteration_bounds = array<i64: 1>, scalar_prefetch = 0 : i64, scratch_operands = 0 : i64, tpu.core_type = #tpu.core_type<tc>, window_params = [{transform_indices = @transform_0, window_bounds = array<i64: 8, 128>}, {pipeline_mode = #tpu.pipeline_mode<synchronous>, transform_indices = @transform_1, window_bounds = array<i64: 128, 128>}, {transform_indices = @transform_2, window_bounds = array<i64: 8, 128>}, {transform_indices = @transform_3, window_bounds = array<i64: 1, 8, 128>}]} {
    %c0 = arith.constant 0 : index
    %c0_0 = arith.constant 0 : index
    %0 = vector.load %arg1[%c0, %c0_0] : memref<8x128xf32, #tpu.memory_space<vmem>>, vector<8x128xf32>
    %1 = arith.mulf %0, %0 : vector<8x128xf32>
    %cst = arith.constant dense<0.000000e+00> : vector<8xf32>
    %2 = vector.multi_reduction <add>, %1, %cst [1] : vector<8x128xf32> to vector<8xf32>
    %3 = vector.shape_cast %2 : vector<8xf32> to vector<8x1xf32>
    %cst_1 = arith.constant 1.000000e-16 : f32
    %4 = vector.broadcast %cst_1 : f32 to vector<8x1xf32>
    %5 = arith.maximumf %3, %4 : vector<8x1xf32>
    %6 = math.rsqrt %5 : vector<8x1xf32>
    %7 = vector.broadcast %6 : vector<8x1xf32> to vector<8x128xf32>
    %8 = arith.mulf %0, %7 : vector<8x128xf32>
    %c0_2 = arith.constant 0 : index
    %c0_3 = arith.constant 0 : index
    %9 = vector.load %arg2[%c0_2, %c0_3] : memref<128x128xf32, #tpu.memory_space<vmem>>, vector<128x128xf32>
    %cst_4 = arith.constant dense<0.000000e+00> : vector<8x128xf32>
    %10 = tpu.matmul %8, %9, %cst_4 {dimension_numbers = #tpu.dot_dimension_numbers<[1], [1], [0], [0], [0, 0, 1, 0], [], []>} : vector<8x128xf32>, vector<128x128xf32>, vector<8x128xf32> -> vector<8x128xf32>
    %c0_5 = arith.constant 0 : index
    %c0_6 = arith.constant 0 : index
    %11 = vector.load %arg3[%c0_5, %c0_6] : memref<8x128xf32, #tpu.memory_space<vmem>>, vector<8x128xf32>
    %12 = arith.mulf %8, %11 : vector<8x128xf32>
    %cst_7 = arith.constant dense<0.000000e+00> : vector<8xf32>
    %13 = vector.multi_reduction <add>, %12, %cst_7 [1] : vector<8x128xf32> to vector<8xf32>
    %14 = vector.shape_cast %13 : vector<8xf32> to vector<8x1xf32>
    %c8_i32 = arith.constant 8 : i32
    %15 = arith.muli %arg0, %c8_i32 : i32
    %16 = tpu.iota {dimensions = array<i32: 0>} : vector<8x1xi32>
    %17 = vector.broadcast %15 : i32 to vector<8x1xi32>
    %18 = arith.addi %17, %16 : vector<8x1xi32>
    %c8_i32_8 = arith.constant 8 : i32
    %19 = vector.broadcast %c8_i32_8 : i32 to vector<8x1xi32>
    %20 = arith.cmpi slt, %18, %19 : vector<8x1xi32>
    %cst_9 = arith.constant 1.000000e-01 : f32
    %21 = vector.broadcast %cst_9 : f32 to vector<8x1xf32>
    %22 = arith.subf %21, %14 : vector<8x1xf32>
    %cst_10 = arith.constant -1.000000e+30 : f32
    %23 = vector.broadcast %cst_10 : f32 to vector<8x1xf32>
    %24 = arith.select %20, %22, %23 : vector<8x1xi1>, vector<8x1xf32>
    %25 = vector.broadcast %24 : vector<8x1xf32> to vector<8x128xf32>
    %26 = arith.addf %10, %25 : vector<8x128xf32>
    %cst_11 = arith.constant 0.000000e+00 : f32
    %27 = vector.broadcast %cst_11 : f32 to vector<8x128xf32>
    %28 = arith.maximumf %27, %26 : vector<8x128xf32>
    %cst_12 = arith.constant 0.000000e+00 : f32
    %29 = vector.broadcast %cst_12 : f32 to vector<8x1xf32>
    %30 = arith.maximumf %29, %24 : vector<8x1xf32>
    %31 = vector.shape_cast %30 : vector<8x1xf32> to vector<1x8x1xf32>
    %cst_13 = arith.constant dense<0.000000e+00> : vector<1xf32>
    %32 = vector.multi_reduction <add>, %31, %cst_13 [1, 2] : vector<1x8x1xf32> to vector<1xf32>
    %33 = vector.shape_cast %32 : vector<1xf32> to vector<1x1x1xf32>
    %34 = vector.extract %33[0, 0, 0] : f32 from vector<1x1x1xf32>
    %cst_14 = arith.constant 1.120000e+02 : f32
    %35 = arith.mulf %cst_14, %34 : f32
    %c8_i32_15 = arith.constant 8 : i32
    %36 = arith.muli %arg0, %c8_i32_15 : i32
    %c8_i32_16 = arith.constant 8 : i32
    %37 = arith.subi %c8_i32_16, %36 : i32
    %c0_i32 = arith.constant 0 : i32
    %c8_i32_17 = arith.constant 8 : i32
    %38 = arith.maxsi %c0_i32, %37 : i32
    %39 = arith.minsi %c8_i32_17, %38 : i32
    %40 = arith.sitofp %39 : i32 to f32
    %41 = vector.shape_cast %28 : vector<8x128xf32> to vector<1x8x128xf32>
    %cst_18 = arith.constant dense<0.000000e+00> : vector<1xf32>
    %42 = vector.multi_reduction <add>, %41, %cst_18 [1, 2] : vector<1x8x128xf32> to vector<1xf32>
    %43 = vector.shape_cast %42 : vector<1xf32> to vector<1x1x1xf32>
    %44 = vector.extract %43[0, 0, 0] : f32 from vector<1x1x1xf32>
    %45 = arith.subf %44, %35 : f32
    %cst_19 = arith.constant 1.000000e-01 : f32
    %46 = arith.mulf %cst_19, %40 : f32
    %47 = arith.subf %45, %46 : f32
    %48 = vector.broadcast %47 : f32 to vector<1x8x128xf32>
    %c0_20 = arith.constant 0 : index
    %c0_21 = arith.constant 0 : index
    %c0_22 = arith.constant 0 : index
    %49 = vector.load %arg4[%c0_20, %c0_21, %c0_22] : memref<1x8x128xf32, #tpu.memory_space<vmem>>, vector<1x8x128xf32>
    tpu.vector_store %arg4[%c0_20, %c0_21, %c0_22], %48 {strides = array<i32>} : memref<1x8x128xf32, #tpu.memory_space<vmem>>, vector<1x8x128xf32>,
    return
  }
  func.func @transform_0(%arg0: i32) -> (i32, i32) {
    %c0_i32 = arith.constant 0 : i32
    %c0_i32_0 = arith.constant 0 : i32
    return %arg0, %c0_i32 : i32, i32
  }
  func.func @transform_1(%arg0: i32) -> (i32, i32) {
    %c0_i32 = arith.constant 0 : i32
    %c0_i32_0 = arith.constant 0 : i32
    %c0_i32_1 = arith.constant 0 : i32
    return %c0_i32, %c0_i32_0 : i32, i32
  }
  func.func @transform_2(%arg0: i32) -> (i32, i32) {
    %c0_i32 = arith.constant 0 : i32
    %c0_i32_0 = arith.constant 0 : i32
    return %arg0, %c0_i32 : i32, i32
  }
  func.func @transform_3(%arg0: i32) -> (i32, i32, i32) {
    %c0_i32 = arith.constant 0 : i32
    %c0_i32_0 = arith.constant 0 : i32
    %c0_i32_1 = arith.constant 0 : i32
    return %arg0, %c0_i32, %c0_i32_0 : i32, i32, i32
  }
}

</mosaic_0001>

<llo_original>
// kernel: tpu_custom_call.1
$region0: #{tpu_custom_call.1}
  #allocation0 [shape = 'u32[]', space=smem, size = 0x4, offset = 0x4, fixed_abs, tag = 'smem constant byte address 0x4 - core index']
  #allocation1 [shape = 'u32[144,128]{1,0:T(1,128)}', space=vmem, size = 0x12000, scoped, tag = 'internal scratch']
  %s0 = inlined_call_operand.hbm [shape: f32[8,128], index: 0, kind: input, shape index: {}]
  %s1 = inlined_call_operand.hbm [shape: f32[128,128], index: 1, kind: input, shape index: {}]
  %s2 = inlined_call_operand.hbm [shape: f32[8,128], index: 2, kind: input, shape index: {}]
  %s3 = inlined_call_operand.hbm [shape: f32[1,8,128], index: 3, kind: output, shape index: {}]
  %s4 = sld [smem:[#allocation0]]
  $region34: #{tpu_custom_call.1} parent=0
    _
  %s6 = ssub.s32 1, %s4
  %s7 = scalar_select 0, %s6, %s4
  $region1: #{tpu_custom_call.1} parent=0
    #allocation2 [shape = 'u8[4096]{0}', space=vmem, size = 0x1000, scoped, tag = 'input window, operand 0, single buffered']
    #allocation3 [shape = 's32[1]{0}', space=sflag, size = 0x4, scoped, tag = 'scoped memory for tpu_custom_call.1']
    #allocation4 [shape = 's32[1]{0}', space=sflag, size = 0x4, scoped, tag = 'scoped memory for tpu_custom_call.1']
    #allocation5 [shape = 'u8[65536]{0}', space=vmem, size = 0x10000, scoped, tag = 'input window, operand 1, single buffered']
    #allocation6 [shape = 's32[1]{0}', space=sflag, size = 0x4, scoped, tag = 'scoped memory for tpu_custom_call.1']
    #allocation7 [shape = 'u8[4096]{0}', space=vmem, size = 0x1000, scoped, tag = 'input window, operand 2, single buffered']
    #allocation8 [shape = 'u8[4096]{0}', space=vmem, size = 0x1000, scoped, tag = 'output window, operand 0, single buffered']
    %8 = vsyncpa [#allocation3], 0
    %9 = vsyncpa [#allocation6], 0
    %10 = vsyncpa [#allocation4], 0
    // Predicated region
    $region2: #{tpu_custom_call.1} parent=1 // pred_check
      _
    $region3: #{tpu_custom_call.1} parent=1 // pred_check_branch
      %12 = sbr.rel (0) target = $region5
    $region4: #{tpu_custom_call.1} parent=1 // pred_region
      %s14 = ssub.s32 128, 128
      %15 = vsyncadd [#allocation3], %s14
      %s17 = sshll.u32 [#allocation2], 4
      %s18 = int_to_ptr.vmem [resolvable:$true] %s17
      %20 = dma.hbm_to_vmem [thread:$0]  %s0, 128, %s18, [#allocation3]
    $region5: #{tpu_custom_call.1} parent=1 // pred_fallthru
      _
    // Predicated region
    $region6: #{tpu_custom_call.1} parent=1 // pred_check
      _
    $region7: #{tpu_custom_call.1} parent=1 // pred_check_branch
      %22 = sbr.rel (0) target = $region9
    $region8: #{tpu_custom_call.1} parent=1 // pred_region
      %s24 = ssub.s32 2048, 2048
      %25 = vsyncadd [#allocation6], %s24
      %s26 = sshll.u32 [#allocation5], 4
      %s27 = int_to_ptr.vmem [resolvable:$true] %s26
      %32 = dma.hbm_to_vmem [thread:$0]  %s1, 2048, %s27, [#allocation6], 128, 128, 8
    $region9: #{tpu_custom_call.1} parent=1 // pred_fallthru
      _
    // Predicated region
    $region10: #{tpu_custom_call.1} parent=1 // pred_check
      _
    $region11: #{tpu_custom_call.1} parent=1 // pred_check_branch
      %34 = sbr.rel (0) target = $region13
    $region12: #{tpu_custom_call.1} parent=1 // pred_region
      %s36 = ssub.s32 128, 128
      %37 = vsyncadd [#allocation6], %s36
      %s39 = sshll.u32 [#allocation7], 4
      %s40 = int_to_ptr.vmem [resolvable:$true] %s39
      %42 = dma.hbm_to_vmem [thread:$0]  %s2, 128, %s40, [#allocation6]
    $region13: #{tpu_custom_call.1} parent=1 // pred_fallthru
      _
    // Predicated region
    $region14: #{tpu_custom_call.1} parent=1 // pred_check
      _
    $region15: #{tpu_custom_call.1} parent=1 // pred_check_branch
      %44 = sbr.rel (0) target = $region17
    $region16: #{tpu_custom_call.1} parent=1 // pred_region
      %45 = dma.done [#allocation3], 128
    $region17: #{tpu_custom_call.1} parent=1 // pred_fallthru
      _
    // Predicated region
    $region18: #{tpu_custom_call.1} parent=1 // pred_check
      _
    $region19: #{tpu_custom_call.1} parent=1 // pred_check_branch
      %47 = sbr.rel (0) target = $region21
    $region20: #{tpu_custom_call.1} parent=1 // pred_region
      %48 = dma.done [#allocation6], 2048
    $region21: #{tpu_custom_call.1} parent=1 // pred_fallthru
      _
    // Predicated region
    $region22: #{tpu_custom_call.1} parent=1 // pred_check
      _
    $region23: #{tpu_custom_call.1} parent=1 // pred_check_branch
      %50 = sbr.rel (0) target = $region25
    $region24: #{tpu_custom_call.1} parent=1 // pred_region
      %51 = dma.done [#allocation6], 128
    $region25: #{tpu_custom_call.1} parent=1 // pred_fallthru
      _
    %v52 = vld [vmem:[#allocation2] sm:$0xff]
    %v53 = vmul.f32 %v52, %v52
    %54 = vadd.xlane.f32.xlu0 %v53
    %v55 = vpop.xlane.xlu0 %54
    %v56 = vmax.f32 %v55, 1e-16
    %v57 = vrsqrt.pop %v56
    %v58 = vmul.f32 %v52, %v57
    %v59 = vld [vmem:[#allocation5] sm:$0xff]
    %v60 = vld [vmem:[#allocation5 + $0x8] sm:$0xff]
    %v61 = vld [vmem:[#allocation5 + $0x10] sm:$0xff]
    %v62 = vld [vmem:[#allocation5 + $0x18] sm:$0xff]
    %v63 = vld [vmem:[#allocation5 + $0x20] sm:$0xff]
    %v64 = vld [vmem:[#allocation5 + $0x28] sm:$0xff]
    %v65 = vld [vmem:[#allocation5 + $0x30] sm:$0xff]
    %v66 = vld [vmem:[#allocation5 + $0x38] sm:$0xff]
    %v67 = vld [vmem:[#allocation5 + $0x40] sm:$0xff]
    %v68 = vld [vmem:[#allocation5 + $0x48] sm:$0xff]
    %v69 = vld [vmem:[#allocation5 + $0x50] sm:$0xff]
    %v70 = vld [vmem:[#allocation5 + $0x58] sm:$0xff]
    %v71 = vld [vmem:[#allocation5 + $0x60] sm:$0xff]
    %v72 = vld [vmem:[#allocation5 + $0x68] sm:$0xff]
    %v73 = vld [vmem:[#allocation5 + $0x70] sm:$0xff]
    %v74 = vld [vmem:[#allocation5 + $0x78] sm:$0xff]
    %v75 = vld [vmem:[#allocation7] sm:$0xff]
    %v76 = vmul.f32 %v58, %v75
    %77 = vadd.xlane.f32.xlu0 %v76
    %v78 = vpop.xlane.xlu0 %77
    %s79 = smul.u32 0, 8
    %v80 = vlaneseq
    %v81 = vshrl.u32 %v80, 7
    %v82 = vstv %s79
    %v83 = vadd.s32 %v82, %v81
    %vm84 = vcmp.lt.s32.totalorder %v83, 8
    %v85 = vsub.f32 0.1, %v78
    %v86 = vsel %vm84, %v85, -1e+30
    %87 = vmatprep.subr.mxu0 0.0
    %88 = vmatpush1.xpose.msra.mxu0 %v59
    %89 = vmatprep.subr.mxu0 0.0
    %90 = vmatpush1.xpose.msra.mxu0 %v60
    %91 = vmatprep.subr.mxu0 0.0
    %92 = vmatpush1.xpose.msra.mxu0 %v61
    %93 = vmatprep.subr.mxu0 0.0
    %94 = vmatpush1.xpose.msra.mxu0 %v62
    %95 = vmatprep.subr.mxu0 0.0
    %96 = vmatpush1.xpose.msra.mxu0 %v63
    %97 = vmatprep.subr.mxu0 0.0
    %98 = vmatpush1.xpose.msra.mxu0 %v64
    %99 = vmatprep.subr.mxu0 0.0
    %100 = vmatpush1.xpose.msra.mxu0 %v65
    %101 = vmatprep.subr.mxu0 0.0
    %102 = vmatpush1.xpose.msra.mxu0 %v66
    %103 = vmatprep.subr.mxu0 0.0
    %104 = vmatpush1.xpose.msra.mxu0 %v67
    %105 = vmatprep.subr.mxu0 0.0
    %106 = vmatpush1.xpose.msra.mxu0 %v68
    %107 = vmatprep.subr.mxu0 0.0
    %108 = vmatpush1.xpose.msra.mxu0 %v69
    %109 = vmatprep.subr.mxu0 0.0
    %110 = vmatpush1.xpose.msra.mxu0 %v70
    %111 = vmatprep.subr.mxu0 0.0
    %112 = vmatpush1.xpose.msra.mxu0 %v71
    %113 = vmatprep.subr.mxu0 0.0
    %114 = vmatpush1.xpose.msra.mxu0 %v72
    %115 = vmatprep.subr.mxu0 0.0
    %116 = vmatpush1.xpose.msra.mxu0 %v73
    %117 = vmatprep.subr.mxu0 0.0
    %118 = vmatpush1.xpose.msra.mxu0 %v74
    %119 = vmatprep.subr.mxu0 0.0
    %120 = vmatpush1.xpose.msra.mxu0 0.0
    %121 = vmatprep.subr.mxu0 0.0
    %122 = vmatpush1.xpose.msra.mxu0 0.0
    %123 = vmatprep.subr.mxu0 0.0
    %124 = vmatpush1.xpose.msra.mxu0 0.0
    %125 = vmatprep.subr.mxu0 0.0
    %126 = vmatpush1.xpose.msra.mxu0 0.0
    %127 = vmatprep.subr.mxu0 0.0
    %128 = vmatpush1.xpose.msra.mxu0 0.0
    %129 = vmatprep.subr.mxu0 0.0
    %130 = vmatpush1.xpose.msra.mxu0 0.0
    %131 = vmatprep.subr.mxu0 0.0
    %132 = vmatpush1.xpose.msra.mxu0 0.0
    %133 = vmatprep.subr.mxu0 0.0
    %134 = vmatpush1.xpose.msra.mxu0 0.0
    %135 = vmatprep.subr.mxu0 0.0
    %136 = vmatpush1.xpose.msra.mxu0 0.0
    %137 = vmatprep.subr.mxu0 0.0
    %138 = vmatpush1.xpose.msra.mxu0 0.0
    %139 = vmatprep.subr.mxu0 0.0
    %140 = vmatpush1.xpose.msra.mxu0 0.0
    %141 = vmatprep.subr.mxu0 0.0
    %142 = vmatpush1.xpose.msra.mxu0 0.0
    %143 = vmatprep.subr.mxu0 0.0
    %144 = vmatpush1.xpose.msra.mxu0 0.0
    %145 = vmatprep.subr.mxu0 0.0
    %146 = vmatpush1.xpose.msra.mxu0 0.0
    %147 = vmatprep.subr.mxu0 0.0
    %148 = vmatpush1.xpose.msra.mxu0 0.0
    %149 = vmatprep.subr.mxu0 0.0
    %150 = vmatpush1.xpose.msra.mxu0 0.0
    %151 = vmatprep.mubr.f32.mxu0 0.0
    %152 = vmatmul.mubr.f32.gmra.mrb[0].mxu0 %v58
    %v153 = vpop.f32.mrb[0].mxu0
    %v154 = vadd.f32 %v86, %v153
    %v155 = vpop.f32.mrb[0].mxu0
    %156 = vdwg.mxu0
    %v157 = vmax.f32 %v154, 0.0
    %v158 = vmax.f32 %v86, 0.0
    %vm159 = vcmask 7168
    %v160 = vsel %vm159, %v158, 0.0
    %161 = vadd.xlane.f32.xlu0 %v160
    %v162 = vpop.xlane.xlu0 %161
    %v163 = vrot.slane %v162, 4
    %v164 = vadd.f32 %v162, %v163
    %v165 = vrot.slane %v164, 2
    %v166 = vadd.f32 %v164, %v165
    %v167 = vrot.slane %v166, 1
    %v168 = vadd.f32 %v166, %v167
    %s169 = vtos %v168
    %s170 = smul.f32 %s169, 112.0
    %s171 = ssub.s32 8, %s79
    %p172 = scmp.gt.s32.totalorder %s171, 0
    %s173 = scalar_select %p172, %s171, 0
    %p174 = scmp.lt.s32.totalorder %s173, 8
    %s175 = scalar_select %p174, %s173, 8
    %s176 = scvt.s32.f32 %s175
    %177 = vadd.xlane.f32.xlu0 %v157
    %v178 = vpop.xlane.xlu0 %177
    %v179 = vrot.slane %v178, 4
    %v180 = vadd.f32 %v178, %v179
    %v181 = vrot.slane %v180, 2
    %v182 = vadd.f32 %v180, %v181
    %v183 = vrot.slane %v182, 1
    %v184 = vadd.f32 %v182, %v183
    %s185 = vtos %v184
    %s186 = ssub.f32 %s185, %s170
    %s187 = smul.f32 %s176, 0.1
    %s188 = ssub.f32 %s186, %s187
    %v189 = vstv %s188
    %190 = vst [vmem:[#allocation8] sm:$0xff] %v189
    // Predicated region
    $region26: #{tpu_custom_call.1} parent=1 // pred_check
      _
    $region27: #{tpu_custom_call.1} parent=1 // pred_check_branch
      %192 = sbr.rel (0) target = $region29
    $region28: #{tpu_custom_call.1} parent=1 // pred_region
      %s194 = ssub.s32 128, 128
      %195 = vsyncadd [#allocation4], %s194
      %s197 = sshll.u32 [#allocation8], 4
      %s198 = int_to_ptr.vmem [resolvable:$true] %s197
      %200 = dma.vmem_to_hbm [thread:$0]  %s198, 128, %s3, [#allocation4]
    $region29: #{tpu_custom_call.1} parent=1 // pred_fallthru
      _
    // Predicated region
    $region30: #{tpu_custom_call.1} parent=1 // pred_check
      _
    $region31: #{tpu_custom_call.1} parent=1 // pred_check_branch
      %202 = sbr.rel (0) target = $region33
    $region32: #{tpu_custom_call.1} parent=1 // pred_region
      %203 = dma.done [#allocation4], 128
    $region33: #{tpu_custom_call.1} parent=1 // pred_fallthru
      _
    %204 = vsyncpa [#allocation3], 1
    %205 = vsyncpa [#allocation6], 1
    %206 = vsyncpa [#allocation4], 1

// kernel: tpu_custom_call.1
$region0: #{tpu_custom_call.1}
  #allocation0 [shape = 'u32[]', space=smem, size = 0x4, offset = 0x4, fixed_abs, tag = 'smem constant byte address 0x4 - core index']
  #allocation1 [shape = 'u32[144,128]{1,0:T(1,128)}', space=vmem, size = 0x12000, scoped, tag = 'internal scratch']
  %s0 = inlined_call_operand.hbm [shape: f32[8,128], index: 0, kind: input, shape index: {}]
  %s1 = inlined_call_operand.hbm [shape: f32[128,128], index: 1, kind: input, shape index: {}]
  %s2 = inlined_call_operand.hbm [shape: f32[8,128], index: 2, kind: input, shape index: {}]
  %s3 = inlined_call_operand.hbm [shape: f32[1,8,128], index: 3, kind: output, shape index: {}]
  %s4 = sld [smem:[#allocation0]]
  $region34: #{tpu_custom_call.1} parent=0
    _
  %s6 = ssub.s32 1, %s4
  %s7 = scalar_select 0, %s6, %s4
  $region1: #{tpu_custom_call.1} parent=0
    #allocation2 [shape = 'u8[4096]{0}', space=vmem, size = 0x1000, scoped, tag = 'input window, operand 0, single buffered']
    #allocation3 [shape = 's32[1]{0}', space=sflag, size = 0x4, scoped, tag = 'scoped memory for tpu_custom_call.1']
    #allocation4 [shape = 's32[1]{0}', space=sflag, size = 0x4, scoped, tag = 'scoped memory for tpu_custom_call.1']
    #allocation5 [shape = 'u8[65536]{0}', space=vmem, size = 0x10000, scoped, tag = 'input window, operand 1, single buffered']
    #allocation6 [shape = 's32[1]{0}', space=sflag, size = 0x4, scoped, tag = 'scoped memory for tpu_custom_call.1']
    #allocation7 [shape = 'u8[4096]{0}', space=vmem, size = 0x1000, scoped, tag = 'input window, operand 2, single buffered']
    #allocation8 [shape = 'u8[4096]{0}', space=vmem, size = 0x1000, scoped, tag = 'output window, operand 0, single buffered']
    %8 = vsyncpa [#allocation3], 0
    %9 = vsyncpa [#allocation6], 0
    %10 = vsyncpa [#allocation4], 0
    // Predicated region
    $region2: #{tpu_custom_call.1} parent=1 // pred_check
      _
    $region3: #{tpu_custom_call.1} parent=1 // pred_check_branch
      %12 = sbr.rel (0) target = $region5
    $region4: #{tpu_custom_call.1} parent=1 // pred_region
      %s14 = ssub.s32 128, 128
      %15 = vsyncadd [#allocation3], %s14
      %s17 = sshll.u32 [#allocation2], 4
      %s18 = int_to_ptr.vmem [resolvable:$true] %s17
      %20 = dma.hbm_to_vmem [thread:$0]  %s0, 128, %s18, [#allocation3]
    $region5: #{tpu_custom_call.1} parent=1 // pred_fallthru
      _
    // Predicated region
    $region6: #{tpu_custom_call.1} parent=1 // pred_check
      _
    $region7: #{tpu_custom_call.1} parent=1 // pred_check_branch
      %22 = sbr.rel (0) target = $region9
    $region8: #{tpu_custom_call.1} parent=1 // pred_region
      %s24 = ssub.s32 2048, 2048
      %25 = vsyncadd [#allocation6], %s24
      %s26 = sshll.u32 [#allocation5], 4
      %s27 = int_to_ptr.vmem [resolvable:$true] %s26
      %32 = dma.hbm_to_vmem [thread:$0]  %s1, 2048, %s27, [#allocation6], 128, 128, 8
    $region9: #{tpu_custom_call.1} parent=1 // pred_fallthru
      _
    // Predicated region
    $region10: #{tpu_custom_call.1} parent=1 // pred_check
      _
    $region11: #{tpu_custom_call.1} parent=1 // pred_check_branch
      %34 = sbr.rel (0) target = $region13
    $region12: #{tpu_custom_call.1} parent=1 // pred_region
      %s36 = ssub.s32 128, 128
      %37 = vsyncadd [#allocation6], %s36
      %s39 = sshll.u32 [#allocation7], 4
      %s40 = int_to_ptr.vmem [resolvable:$true] %s39
      %42 = dma.hbm_to_vmem [thread:$0]  %s2, 128, %s40, [#allocation6]
    $region13: #{tpu_custom_call.1} parent=1 // pred_fallthru
      _
    // Predicated region
    $region14: #{tpu_custom_call.1} parent=1 // pred_check
      _
    $region15: #{tpu_custom_call.1} parent=1 // pred_check_branch
      %44 = sbr.rel (0) target = $region17
    $region16: #{tpu_custom_call.1} parent=1 // pred_region
      %45 = dma.done [#allocation3], 128
    $region17: #{tpu_custom_call.1} parent=1 // pred_fallthru
      _
    // Predicated region
    $region18: #{tpu_custom_call.1} parent=1 // pred_check
      _
    $region19: #{tpu_custom_call.1} parent=1 // pred_check_branch
      %47 = sbr.rel (0) target = $region21
    $region20: #{tpu_custom_call.1} parent=1 // pred_region
      %48 = dma.done [#allocation6], 2048
    $region21: #{tpu_custom_call.1} parent=1 // pred_fallthru
      _
    // Predicated region
    $region22: #{tpu_custom_call.1} parent=1 // pred_check
      _
    $region23: #{tpu_custom_call.1} parent=1 // pred_check_branch
      %50 = sbr.rel (0) target = $region25
    $region24: #{tpu_custom_call.1} parent=1 // pred_region
      %51 = dma.done [#allocation6], 128
    $region25: #{tpu_custom_call.1} parent=1 // pred_fallthru
      _
    %v52 = vld [vmem:[#allocation2] sm:$0xff]
    %v53 = vmul.f32 %v52, %v52
    %54 = vadd.xlane.f32.xlu0 %v53
    %v55 = vpop.xlane.xlu0 %54
    %v56 = vmax.f32 %v55, 1e-16
    %v57 = vrsqrt.pop %v56
    %v58 = vmul.f32 %v52, %v57
    %v59 = vld [vmem:[#allocation5] sm:$0xff]
    %v60 = vld [vmem:[#allocation5 + $0x8] sm:$0xff]
    %v61 = vld [vmem:[#allocation5 + $0x10] sm:$0xff]
    %v62 = vld [vmem:[#allocation5 + $0x18] sm:$0xff]
    %v63 = vld [vmem:[#allocation5 + $0x20] sm:$0xff]
    %v64 = vld [vmem:[#allocation5 + $0x28] sm:$0xff]
    %v65 = vld [vmem:[#allocation5 + $0x30] sm:$0xff]
    %v66 = vld [vmem:[#allocation5 + $0x38] sm:$0xff]
    %v67 = vld [vmem:[#allocation5 + $0x40] sm:$0xff]
    %v68 = vld [vmem:[#allocation5 + $0x48] sm:$0xff]
    %v69 = vld [vmem:[#allocation5 + $0x50] sm:$0xff]
    %v70 = vld [vmem:[#allocation5 + $0x58] sm:$0xff]
    %v71 = vld [vmem:[#allocation5 + $0x60] sm:$0xff]
    %v72 = vld [vmem:[#allocation5 + $0x68] sm:$0xff]
    %v73 = vld [vmem:[#allocation5 + $0x70] sm:$0xff]
    %v74 = vld [vmem:[#allocation5 + $0x78] sm:$0xff]
    %v75 = vld [vmem:[#allocation7] sm:$0xff]
    %v76 = vmul.f32 %v58, %v75
    %77 = vadd.xlane.f32.xlu0 %v76
    %v78 = vpop.xlane.xlu0 %77
    %s79 = smul.u32 0, 8
    %v80 = vlaneseq
    %v81 = vshrl.u32 %v80, 7
    %v82 = vstv %s79
    %v83 = vadd.s32 %v82, %v81
    %vm84 = vcmp.lt.s32.totalorder %v83, 8
    %v85 = vsub.f32 0.1, %v78
    %v86 = vsel %vm84, %v85, -1e+30
    %87 = vmatprep.subr.mxu0 0.0
    %88 = vmatpush1.xpose.msra.mxu0 %v59
    %89 = vmatprep.subr.mxu0 0.0
    %90 = vmatpush1.xpose.msra.mxu0 %v60
    %91 = vmatprep.subr.mxu0 0.0
    %92 = vmatpush1.xpose.msra.mxu0 %v61
    %93 = vmatprep.subr.mxu0 0.0
    %94 = vmatpush1.xpose.msra.mxu0 %v62
    %95 = vmatprep.subr.mxu0 0.0
    %96 = vmatpush1.xpose.msra.mxu0 %v63
    %97 = vmatprep.subr.mxu0 0.0
    %98 = vmatpush1.xpose.msra.mxu0 %v64
    %99 = vmatprep.subr.mxu0 0.0
    %100 = vmatpush1.xpose.msra.mxu0 %v65
    %101 = vmatprep.subr.mxu0 0.0
    %102 = vmatpush1.xpose.msra.mxu0 %v66
    %103 = vmatprep.subr.mxu0 0.0
    %104 = vmatpush1.xpose.msra.mxu0 %v67
    %105 = vmatprep.subr.mxu0 0.0
    %106 = vmatpush1.xpose.msra.mxu0 %v68
    %107 = vmatprep.subr.mxu0 0.0
    %108 = vmatpush1.xpose.msra.mxu0 %v69
    %109 = vmatprep.subr.mxu0 0.0
    %110 = vmatpush1.xpose.msra.mxu0 %v70
    %111 = vmatprep.subr.mxu0 0.0
    %112 = vmatpush1.xpose.msra.mxu0 %v71
    %113 = vmatprep.subr.mxu0 0.0
    %114 = vmatpush1.xpose.msra.mxu0 %v72
    %115 = vmatprep.subr.mxu0 0.0
    %116 = vmatpush1.xpose.msra.mxu0 %v73
    %117 = vmatprep.subr.mxu0 0.0
    %118 = vmatpush1.xpose.msra.mxu0 %v74
    %119 = vmatprep.subr.mxu0 0.0
    %120 = vmatpush1.xpose.msra.mxu0 0.0
    %121 = vmatprep.subr.mxu0 0.0
    %122 = vmatpush1.xpose.msra.mxu0 0.0
    %123 = vmatprep.subr.mxu0 0.0
    %124 = vmatpush1.xpose.msra.mxu0 0.0
    %125 = vmatprep.subr.mxu0 0.0
    %126 = vmatpush1.xpose.msra.mxu0 0.0
    %127 = vmatprep.subr.mxu0 0.0
    %128 = vmatpush1.xpose.msra.mxu0 0.0
    %129 = vmatprep.subr.mxu0 0.0
    %130 = vmatpush1.xpose.msra.mxu0 0.0
    %131 = vmatprep.subr.mxu0 0.0
    %132 = vmatpush1.xpose.msra.mxu0 0.0
    %133 = vmatprep.subr.mxu0 0.0
    %134 = vmatpush1.xpose.msra.mxu0 0.0
    %135 = vmatprep.subr.mxu0 0.0
    %136 = vmatpush1.xpose.msra.mxu0 0.0
    %137 = vmatprep.subr.mxu0 0.0
    %138 = vmatpush1.xpose.msra.mxu0 0.0
    %139 = vmatprep.subr.mxu0 0.0
    %140 = vmatpush1.xpose.msra.mxu0 0.0
    %141 = vmatprep.subr.mxu0 0.0
    %142 = vmatpush1.xpose.msra.mxu0 0.0
    %143 = vmatprep.subr.mxu0 0.0
    %144 = vmatpush1.xpose.msra.mxu0 0.0
    %145 = vmatprep.subr.mxu0 0.0
    %146 = vmatpush1.xpose.msra.mxu0 0.0
    %147 = vmatprep.subr.mxu0 0.0
    %148 = vmatpush1.xpose.msra.mxu0 0.0
    %149 = vmatprep.subr.mxu0 0.0
    %150 = vmatpush1.xpose.msra.mxu0 0.0
    %151 = vmatprep.mubr.f32.mxu0 0.0
    %152 = vmatmul.mubr.f32.gmra.mrb[0].mxu0 %v58
    %v153 = vpop.f32.mrb[0].mxu0
    %v154 = vadd.f32 %v86, %v153
    %v155 = vpop.f32.mrb[0].mxu0
    %156 = vdwg.mxu0
    %v157 = vmax.f32 %v154, 0.0
    %v158 = vmax.f32 %v86, 0.0
    %vm159 = vcmask 7168
    %v160 = vsel %vm159, %v158, 0.0
    %161 = vadd.xlane.f32.xlu0 %v160
    %v162 = vpop.xlane.xlu0 %161
    %v163 = vrot.slane %v162, 4
    %v164 = vadd.f32 %v162, %v163
    %v165 = vrot.slane %v164, 2
    %v166 = vadd.f32 %v164, %v165
    %v167 = vrot.slane %v166, 1
    %v168 = vadd.f32 %v166, %v167
    %s169 = vtos %v168
    %s170 = smul.f32 %s169, 112.0
    %s171 = ssub.s32 8, %s79
    %p172 = scmp.gt.s32.totalorder %s171, 0
    %s173 = scalar_select %p172, %s171, 0
    %p174 = scmp.lt.s32.totalorder %s173, 8
    %s175 = scalar_select %p174, %s173, 8
    %s176 = scvt.s32.f32 %s175
    %177 = vadd.xlane.f32.xlu0 %v157
    %v178 = vpop.xlane.xlu0 %177
    %v179 = vrot.slane %v178, 4
    %v180 = vadd.f32 %v178, %v179
    %v181 = vrot.slane %v180, 2
    %v182 = vadd.f32 %v180, %v181
    %v183 = vrot.slane %v182, 1
    %v184 = vadd.f32 %v182, %v183
    %s185 = vtos %v184
    %s186 = ssub.f32 %s185, %s170
    %s187 = smul.f32 %s176, 0.1
    %s188 = ssub.f32 %s186, %s187
    %v189 = vstv %s188
    %190 = vst [vmem:[#allocation8] sm:$0xff] %v189
    // Predicated region
    $region26: #{tpu_custom_call.1} parent=1 // pred_check
      _
    $region27: #{tpu_custom_call.1} parent=1 // pred_check_branch
      %192 = sbr.rel (0) target = $region29
    $region28: #{tpu_custom_call.1} parent=1 // pred_region
      %s194 = ssub.s32 128, 128
      %195 = vsyncadd [#allocation4], %s194
      %s197 = sshll.u32 [#allocation8], 4
      %s198 = int_to_ptr.vmem [resolvable:$true] %s197
      %200 = dma.vmem_to_hbm [thread:$0]  %s198, 128, %s3, [#allocation4]
    $region29: #{tpu_custom_call.1} parent=1 // pred_fallthru
      _
    // Predicated region
    $region30: #{tpu_custom_call.1} parent=1 // pred_check
      _
    $region31: #{tpu_custom_call.1} parent=1 // pred_check_branch
      %202 = sbr.rel (0) target = $region33
    $region32: #{tpu_custom_call.1} parent=1 // pred_region
      %203 = dma.done [#allocation4], 128
    $region33: #{tpu_custom_call.1} parent=1 // pred_fallthru
      _
    %204 = vsyncpa [#allocation3], 1
    %205 = vsyncpa [#allocation6], 1
    %206 = vsyncpa [#allocation4], 1

</llo_original>
